<compile_context>
chip_gen: v5e
topology: v5e:2x2
jax: 0.10.0
libtpu: 0.0.40
codegen_flags: <defaults>
</compile_context>

<pallas_src>
import functools

import jax
import jax.numpy as jnp
from jax.experimental import pallas as pl
from jax.experimental.pallas import tpu as pltpu

_LANES = 128


def _sublane_multiple(dtype) -> int:
    # Packed-tile second-minor multiple: 8 (f32), 16 (bf16), 32 (int8).
    return 8 * max(1, 4 // jnp.dtype(dtype).itemsize)


def _default_tiling():
    """Return (block_bytes, vmem_limit_bytes) tuned per TPU generation."""
    vmem_cap = 128 * 1024 * 1024
    try:
        vmem_cap = int(pltpu.get_tpu_info().vmem_capacity_bytes)
    except Exception:
        pass
    if vmem_cap <= 96 * 1024 * 1024:
        # v7x-class: 64 MiB VMEM per TensorCore, ~3.2 TB/s HBM.  8 MiB blocks
        # amortise the per-step overhead to <10%; 4x block (double-buffered
        # in+out = 32 MiB) stays well under 64 MiB with a 48 MiB scoped limit.
        return 8 * 1024 * 1024, 48 * 1024 * 1024
    # v5e / v6e: 128 MiB VMEM.  4 MiB blocks (8192 rows of f32) reach ~95% of
    # the HBM roofline; raise the scoped-VMEM limit above v5e's 16 MiB default.
    return 4 * 1024 * 1024, 40 * 1024 * 1024


def _round_block_rows(rows, sub, target):
    if rows <= sub:
        return rows                      # block == full dim: always legal
    br = min(max(target, sub), rows)
    return max(sub, (br // sub) * sub)   # multiple of packed-tile sublanes


def _pact_kernel(params_ref, x_ref, o_ref, *, dequantize):
    # params_ref (SMEM, f32[3]): [scale, clip_val, 1/scale], precomputed once
    # in the wrapper so no per-grid-step scalar divides are needed.
    scale = params_ref[0]
    clip = params_ref[1]
    x = x_ref[...].astype(jnp.float32)           # bf16 inputs compute in f32
    y = jnp.clip(x, 0.0, clip)                   # torch.clamp(input, 0, clip)
    y = jnp.floor(scale * y)                     # torch.floor(scale * y)
    if dequantize:
        y = y * params_ref[2]                    # y / scale (as y * (1/scale))
    o_ref[...] = y.astype(o_ref.dtype)


def _run_slab(x2d, params, br, dequantize, vmem_limit_bytes, cost):
    rows, lanes = x2d.shape
    kernel = functools.partial(_pact_kernel, dequantize=dequantize)
    return pl.pallas_call(
        kernel,
        out_shape=jax.ShapeDtypeStruct((rows, lanes), x2d.dtype),
        grid_spec=pltpu.PrefetchScalarGridSpec(
            num_scalar_prefetch=0,
            grid=(pl.cdiv(rows, br),),
            in_specs=[
                pl.BlockSpec(memory_space=pltpu.MemorySpace.SMEM),  # params
                pl.BlockSpec((br, lanes), lambda i: (i, 0)),        # x tile
            ],
            out_specs=pl.BlockSpec((br, lanes), lambda i: (i, 0)),
        ),
        compiler_params=pltpu.CompilerParams(
            dimension_semantics=("parallel",),   # megacore-shardable on v7x
            vmem_limit_bytes=vmem_limit_bytes,
        ),
        cost_estimate=cost,
    )(params, x2d)


def pact_act_forward(x, clip_val, num_bits, dequantize=True, *,
                     block_bytes=None, vmem_limit_bytes=None):
    """PACT fake-quantization of activations (forward only).

    x        : float32 / bfloat16 array of any shape (e.g. NCHW activations).
    clip_val : float32 array of shape (1,) -- the learned clip parameter.
    """
    orig_shape = x.shape
    orig_dtype = x.dtype
    total = x.size
    if total == 0:
        return x

    itemsize = jnp.dtype(orig_dtype).itemsize
    sub = _sublane_multiple(orig_dtype)

    if block_bytes is None or vmem_limit_bytes is None:
        default_bb, default_vl = _default_tiling()
        block_bytes = block_bytes or default_bb
        vmem_limit_bytes = vmem_limit_bytes or default_vl

    # Hoisted scalar math: one divide on clip_val, shared by every block.
    clip = clip_val.reshape(()).astype(jnp.float32)
    n_levels = jnp.float32(2 ** num_bits - 1)
    scale = n_levels / clip
    params = jnp.stack([scale, clip, 1.0 / scale])

    cost = pl.CostEstimate(flops=5 * total, transcendentals=0,
                           bytes_accessed=2 * total * itemsize)

    if total % _LANES == 0:
        # Fast path: lane-dense (rows, 128) slab -- pure reshapes, no copies.
        rows = total // _LANES
        x2d = x.reshape(rows, _LANES)
        br = _round_block_rows(rows, sub, block_bytes // (_LANES * itemsize))
        out2d = _run_slab(x2d, params, br, dequantize, vmem_limit_bytes, cost)
        return out2d.reshape(orig_shape)

    # General path (flat size not a multiple of 128): collapse to
    # (rows, last_dim) with zero-copy reshapes.  The block spans the full last
    # dim so neither an input pad nor an output slice (each a full HBM
    # read+write) is needed; only the last block is partial in rows, which
    # Pallas masks automatically.
    if x.ndim >= 2:
        lanes = orig_shape[-1]
        rows = total // lanes
    else:
        lanes, rows = total, 1
    # TODO(synk): a huge odd-length 1-D input (rows==1, lanes==total) would
    # need chunking along the lane dim; not handled here.
    x2d = x.reshape(rows, lanes)
    br = _round_block_rows(rows, sub, max(1, block_bytes // (lanes * itemsize)))
    out2d = _run_slab(x2d, params, br, dequantize, vmem_limit_bytes, cost)
    return out2d.reshape(orig_shape)


class PACTActJax:
    """Minimal JAX analogue of the PyTorch PACT_Act module (forward only)."""

    # TODO(synk): the STE backward of PACT_Act_STE (grad_input / grad_alpha
    # masking) is not implemented -- forward-only, matching requested scope.
    # TODO(synk): optional int8/uint8 output for dequantize=False (quarters
    # the store traffic) is not wired up; outputs keep the input dtype.

    def __init__(self, num_bits, cout=None, init_clip_val=6.0, dequantize=True):
        self.num_bits = num_bits
        self.clip_val = jnp.array([init_clip_val], dtype=jnp.float32)
        self.dequantize = dequantize

    def __call__(self, x):
        return pact_act_forward(x, self.clip_val, self.num_bits,
                                self.dequantize)


def _reference(x, clip_val, num_bits, dequantize):
    # Same math/order as PACT_Act_STE.forward (computed in f32).
    x = x.astype(jnp.float32)
    clip = clip_val[0]
    scale = (2 ** num_bits - 1) / clip
    y = jnp.floor(scale * jnp.clip(x, 0.0, clip))
    if dequantize:
        y = y / scale
    return y


if __name__ == "__main__":
    key = jax.random.PRNGKey(0)
    quantizer = PACTActJax(num_bits=4, init_clip_val=6.0, dequantize=True)

    # NCHW activations (total % 128 == 0 -> lane-dense fast path).
    x = jax.random.normal(key, (2, 4, 16, 16), dtype=jnp.float32) * 4.0
    y = jax.block_until_ready(quantizer(x))
    ref = _reference(x, quantizer.clip_val, quantizer.num_bits, True)
    assert y.shape == x.shape and y.dtype == x.dtype
    assert jnp.allclose(y, ref, atol=1e-5, rtol=1e-5), "mismatch (aligned)"

    # Odd-sized tensor -> general (rows, last_dim) path, no pad/slice copies.
    x2 = jax.random.normal(jax.random.PRNGKey(1), (3, 5, 7, 11),
                           dtype=jnp.float32) * 4.0
    y2 = jax.block_until_ready(quantizer(x2))
    ref2 = _reference(x2, quantizer.clip_val, quantizer.num_bits, True)
    assert y2.shape == x2.shape and y2.dtype == x2.dtype
    assert jnp.allclose(y2, ref2, atol=1e-5, rtol=1e-5), "mismatch (odd shape)"

    # dequantize=False path (integer levels, stored in the input dtype).
    q_only = PACTActJax(num_bits=4, init_clip_val=6.0, dequantize=False)
    y3 = jax.block_until_ready(q_only(x))
    ref3 = _reference(x, q_only.clip_val, q_only.num_bits, False)
    assert jnp.allclose(y3, ref3, atol=1e-5, rtol=1e-5), "mismatch (no dequant)"

    # bf16 activations: halves HBM traffic; math runs in f32 in-kernel.
    xb = x.astype(jnp.bfloat16)
    yb = jax.block_until_ready(quantizer(xb))
    refb = _reference(xb, quantizer.clip_val, quantizer.num_bits, True)
    assert yb.dtype == jnp.bfloat16 and yb.shape == xb.shape
    assert jnp.allclose(yb.astype(jnp.float32), refb, atol=5e-2, rtol=5e-2), \
        "mismatch (bf16)"

    print("KERNEL_OK")
</pallas_src>

<mosaic_0001>
module attributes {stable_mosaic.version = 11 : i64} {
  func.func @_pact_kernel(%arg0: i32, %arg1: memref<3xf32, #tpu.memory_space<smem>>, %arg2: memref<16x128xf32, #tpu.memory_space<vmem>>, %arg3: memref<16x128xf32, #tpu.memory_space<vmem>>) attributes {dimension_semantics = [#tpu.dimension_semantics<parallel>], iteration_bounds = array<i64: 1>, scalar_prefetch = 0 : i64, scratch_operands = 0 : i64, tpu.core_type = #tpu.core_type<tc>, window_params = [{transform_indices = @transform_0, window_bounds = array<i64: 3>}, {transform_indices = @transform_1, window_bounds = array<i64: 16, 128>}, {transform_indices = @transform_2, window_bounds = array<i64: 16, 128>}]} {
    %c0 = arith.constant 0 : index
    %0 = memref.load %arg1[%c0] : memref<3xf32, #tpu.memory_space<smem>>
    %c1 = arith.constant 1 : index
    %1 = memref.load %arg1[%c1] : memref<3xf32, #tpu.memory_space<smem>>
    %c0_0 = arith.constant 0 : index
    %c0_1 = arith.constant 0 : index
    %2 = vector.load %arg2[%c0_0, %c0_1] : memref<16x128xf32, #tpu.memory_space<vmem>>, vector<16x128xf32>
    %cst = arith.constant 0.000000e+00 : f32
    %3 = vector.broadcast %cst : f32 to vector<16x128xf32>
    %4 = arith.maximumf %3, %2 : vector<16x128xf32>
    %5 = vector.broadcast %1 : f32 to vector<16x128xf32>
    %6 = arith.minimumf %5, %4 : vector<16x128xf32>
    %7 = vector.broadcast %0 : f32 to vector<16x128xf32>
    %8 = arith.mulf %7, %6 : vector<16x128xf32>
    %9 = math.floor %8 : vector<16x128xf32>
    %c2 = arith.constant 2 : index
    %10 = memref.load %arg1[%c2] : memref<3xf32, #tpu.memory_space<smem>>
    %11 = vector.broadcast %10 : f32 to vector<16x128xf32>
    %12 = arith.mulf %9, %11 : vector<16x128xf32>
    %c0_2 = arith.constant 0 : index
    %c0_3 = arith.constant 0 : index
    %13 = vector.load %arg3[%c0_2, %c0_3] : memref<16x128xf32, #tpu.memory_space<vmem>>, vector<16x128xf32>
    tpu.vector_store %arg3[%c0_2, %c0_3], %12 {strides = array<i32>} : memref<16x128xf32, #tpu.memory_space<vmem>>, vector<16x128xf32>,
    return
  }
  func.func @transform_0(%arg0: i32) -> i32 {
    %c0_i32 = arith.constant 0 : i32
    %c0_i32_0 = arith.constant 0 : i32
    return %c0_i32 : i32
  }
  func.func @transform_1(%arg0: i32) -> (i32, i32) {
    %c0_i32 = arith.constant 0 : i32
    %c0_i32_0 = arith.constant 0 : i32
    return %arg0, %c0_i32 : i32, i32
  }
  func.func @transform_2(%arg0: i32) -> (i32, i32) {
    %c0_i32 = arith.constant 0 : i32
    %c0_i32_0 = arith.constant 0 : i32
    return %arg0, %c0_i32 : i32, i32
  }
}

</mosaic_0001>

<llo_original>
// kernel: tpu_custom_call.1
$region0: #{tpu_custom_call.1}
  #allocation0 [shape = 'u32[]', space=smem, size = 0x4, offset = 0x4, fixed_abs, tag = 'smem constant byte address 0x4 - core index']
  #allocation1 [shape = 'u32[72,128]{1,0:T(1,128)}', space=vmem, size = 0x9000, scoped, tag = 'internal scratch']
  %s0 = inlined_call_operand.hbm [shape: f32[3], index: 0, kind: input, shape index: {}]
  %s1 = inlined_call_operand.hbm [shape: f32[16,128], index: 1, kind: input, shape index: {}]
  %s2 = inlined_call_operand.hbm [shape: f32[16,128], index: 2, kind: output, shape index: {}]
  %s3 = sld [smem:[#allocation0]]
  $region26: #{tpu_custom_call.1} parent=0
    _
  %s5 = ssub.s32 1, %s3
  %s6 = scalar_select 0, %s5, %s3
  $region1: #{tpu_custom_call.1} parent=0
    #allocation2 [shape = 'u8[512]{0}', space=smem, size = 0x200, scoped, tag = 'input window, operand 0, single buffered']
    #allocation3 [shape = 's32[1]{0}', space=sflag, size = 0x4, scoped, tag = 'scoped memory for tpu_custom_call.1']
    #allocation4 [shape = 's32[1]{0}', space=sflag, size = 0x4, scoped, tag = 'scoped memory for tpu_custom_call.1']
    #allocation5 [shape = 's32[1]{0}', space=sflag, size = 0x4, scoped, tag = 'scoped memory for tpu_custom_call.1']
    #allocation6 [shape = 'u8[8192]{0}', space=vmem, size = 0x2000, scoped, tag = 'input window, operand 1, single buffered']
    #allocation7 [shape = 'u8[8192]{0}', space=vmem, size = 0x2000, scoped, tag = 'output window, operand 0, single buffered']
    %7 = vsyncpa [#allocation5], 0
    %8 = vsyncpa [#allocation3], 0
    %9 = vsyncpa [#allocation4], 0
    // Predicated region
    $region2: #{tpu_custom_call.1} parent=1 // pred_check
      _
    $region3: #{tpu_custom_call.1} parent=1 // pred_check_branch
      %11 = sbr.rel (0) target = $region5
    $region4: #{tpu_custom_call.1} parent=1 // pred_region
      %13 = vsyncadd [#allocation5], 0
      %s15 = sshll.u32 %s0, 4
      %s16 = int_to_ptr.hbm [resolvable:$true] %s15
      %18 = dma.hbm_to_smem %s16, 16, [#allocation2], [#allocation5]
    $region5: #{tpu_custom_call.1} parent=1 // pred_fallthru
      _
    // Predicated region
    $region6: #{tpu_custom_call.1} parent=1 // pred_check
      _
    $region7: #{tpu_custom_call.1} parent=1 // pred_check_branch
      %20 = sbr.rel (0) target = $region9
    $region8: #{tpu_custom_call.1} parent=1 // pred_region
      %22 = vsyncadd [#allocation3], 0
      %s23 = sshll.u32 %s1, 4
      %s24 = int_to_ptr.hbm [resolvable:$true] %s23
      %s25 = sshll.u32 [#allocation6], 4
      %s26 = int_to_ptr.vmem [resolvable:$true] %s25
      %31 = dma.hbm_to_vmem [thread:$0]  %s24, 256, %s26, [#allocation3], 128, 128, 8
    $region9: #{tpu_custom_call.1} parent=1 // pred_fallthru
      _
    // Predicated region
    $region10: #{tpu_custom_call.1} parent=1 // pred_check
      _
    $region11: #{tpu_custom_call.1} parent=1 // pred_check_branch
      %33 = sbr.rel (0) target = $region13
    $region12: #{tpu_custom_call.1} parent=1 // pred_region
      %35 = dma.done [#allocation5], 16
    $region13: #{tpu_custom_call.1} parent=1 // pred_fallthru
      _
    // Predicated region
    $region14: #{tpu_custom_call.1} parent=1 // pred_check
      _
    $region15: #{tpu_custom_call.1} parent=1 // pred_check_branch
      %37 = sbr.rel (0) target = $region17
    $region16: #{tpu_custom_call.1} parent=1 // pred_region
      %39 = dma.done [#allocation3], 256
    $region17: #{tpu_custom_call.1} parent=1 // pred_fallthru
      _
    %40 = sfence
    %s41 = sld [smem:[#allocation2]]
    %s42 = sld [smem:[#allocation2 + $0x1]]
    %v43 = vld [vmem:[#allocation6] sm:$0xff]
    %v44 = vld [vmem:[#allocation6 + $0x8] sm:$0xff]
    %v45 = vmax.f32 %v43, 0.0
    %v46 = vmax.f32 %v44, 0.0
    %v47 = vstv %s42
    %v48 = vmin.f32 %v47, %v45
    %v49 = vmin.f32 %v47, %v46
    %v50 = vstv %s41
    %v51 = vmul.f32 %v50, %v48
    %v52 = vmul.f32 %v50, %v49
    %v53 = vfloor.f32 %v51
    %v54 = vfloor.f32 %v52
    %s55 = sld [smem:[#allocation2 + $0x2]]
    %v56 = vstv %s55
    %v57 = vmul.f32 %v53, %v56
    %v58 = vmul.f32 %v54, %v56
    %59 = vst [vmem:[#allocation7] sm:$0xff] %v57
    %60 = vst [vmem:[#allocation7 + $0x8] sm:$0xff] %v58
    // Predicated region
    $region18: #{tpu_custom_call.1} parent=1 // pred_check
      _
    $region19: #{tpu_custom_call.1} parent=1 // pred_check_branch
      %62 = sbr.rel (0) target = $region21
    $region20: #{tpu_custom_call.1} parent=1 // pred_region
      %64 = vsyncadd [#allocation4], 0
      %s65 = sshll.u32 [#allocation7], 4
      %s66 = int_to_ptr.vmem [resolvable:$true] %s65
      %s67 = sshll.u32 %s2, 4
      %s68 = int_to_ptr.hbm [resolvable:$true] %s67
      %73 = dma.vmem_to_hbm [thread:$0]  %s66, 256, %s68, [#allocation4], 128, 128, 8
    $region21: #{tpu_custom_call.1} parent=1 // pred_fallthru
      _
    // Predicated region
    $region22: #{tpu_custom_call.1} parent=1 // pred_check
      _
    $region23: #{tpu_custom_call.1} parent=1 // pred_check_branch
      %75 = sbr.rel (0) target = $region25
    $region24: #{tpu_custom_call.1} parent=1 // pred_region
      %77 = dma.done [#allocation4], 256
    $region25: #{tpu_custom_call.1} parent=1 // pred_fallthru
      _
    %78 = vsyncpa [#allocation3], 1
    %79 = vsyncpa [#allocation4], 1
    %80 = vsyncpa [#allocation5], 1

</llo_original>
